<compile_context>
chip_gen: v5e
topology: v5e:2x2
jax: 0.10.0
libtpu: 0.0.40
codegen_flags: <defaults>
</compile_context>

<pallas_src>
from functools import partial

import jax
import jax.numpy as jnp
from jax.experimental import pallas as pl
from jax.experimental.pallas import tpu as pltpu


def _round_up(x, m):
    return (x + m - 1) // m * m


def _vmem_limit_bytes(step_bytes):
    """Per-kernel VMEM cap: generous headroom for double buffering, but never
    more than ~85% of physical VMEM (64 MiB on v7x, 128 MiB on v5e/v6e)."""
    try:
        cap = int(pltpu.get_tpu_info().vmem_capacity_bytes)
    except Exception:
        cap = 64 * 1024 * 1024
    want = max(2 * step_bytes + (8 << 20), 32 << 20)
    return int(min(want, int(cap * 0.85)))


def conv_stats_kernel(p_ref, w_ref, conv_ref, stats_ref, *, n_tiles):
    """One (TM, K) @ (K, TN) MXU tile of the im2col conv (f32 accumulation),
    plus this tile's per-channel sum / sum-of-squares BatchNorm partials.

    The full weight matrix is resident in VMEM; when there is more than one
    cout tile the current one is selected with a 128-aligned dynamic slice, so
    the weight is never re-DMA'd across row tiles.
    """
    if n_tiles == 1:
        w = w_ref[...]
    else:
        tn = conv_ref.shape[-1]
        j = pl.program_id(1)
        w = w_ref[:, pl.ds(pl.multiple_of(j * tn, 128), tn)]

    acc = jnp.dot(p_ref[...], w, preferred_element_type=jnp.float32)
    conv_ref[...] = acc.astype(conv_ref.dtype)          # bf16 slab write

    # BN partials from the f32 accumulator; direct row writes (no concat temp).
    stats_ref[0, 0:1, :] = jnp.sum(acc, axis=0, keepdims=True)
    stats_ref[0, 1:2, :] = jnp.sum(acc * acc, axis=0, keepdims=True)


def bn_relu_kernel(conv_ref, scale_ref, shift_ref, out_ref):
    """Fused BatchNorm affine + ReLU epilogue; f32 math, bf16 in/out, in place."""
    x = conv_ref[...].astype(jnp.float32)
    y = jnp.maximum(x * scale_ref[...] + shift_ref[...], 0.0)
    out_ref[...] = y.astype(out_ref.dtype)


def conv_bn_relu(x_nchw, weight_oihw, gamma, beta, *, stride=1, pad=1, eps=1e-5,
                 block_m=512, block_n=256, mxu_dtype=jnp.bfloat16):
    """Forward of ConvBnReLU. Input/output NCHW to match the PyTorch module."""
    N, Cin, H, W = x_nchw.shape
    Cout, Cin_w, KH, KW = weight_oihw.shape
    assert Cin == Cin_w

    Ho = (H + 2 * pad - KH) // stride + 1
    Wo = (W + 2 * pad - KW) // stride + 1

    # ---- layout plumbing / im2col, done directly in the MXU dtype -----------
    x_nhwc = jnp.transpose(x_nchw, (0, 2, 3, 1)).astype(mxu_dtype)
    xp = jnp.pad(x_nhwc, ((0, 0), (pad, pad), (pad, pad), (0, 0)))
    cols = []
    for kh in range(KH):
        for kw in range(KW):
            cols.append(xp[:, kh:kh + (Ho - 1) * stride + 1:stride,
                           kw:kw + (Wo - 1) * stride + 1:stride, :])
    patches = jnp.concatenate(cols, axis=-1)             # (N, Ho, Wo, KH*KW*Cin)

    K = KH * KW * Cin
    M = N * Ho * Wo

    # Lane-dense output channels; single full-width cout tile when Cout <= 512
    # so the weight/scale/shift blocks never change and kernel 2 streams
    # full-width unmasked vst's.
    Np = _round_up(Cout, 128)
    if Np <= 512:
        TN = Np
    else:
        TN = block_n
        Np = _round_up(Cout, TN)
    n_tiles = Np // TN

    # Don't zero-pad a small contraction dim through HBM; the MXU masks the
    # partial vregs in-register (full-array-dim exemption of the (8,128) rule).
    Kp = K if K <= 128 else _round_up(K, 128)

    in_bytes = jnp.dtype(mxu_dtype).itemsize
    slab_dtype = mxu_dtype                                # bf16 inter-pass slab
    slab_bytes = jnp.dtype(slab_dtype).itemsize

    # Row tile: as large as possible while the double-buffered step set stays
    # comfortably inside v7x's 64 MiB physical VMEM.
    TM = _round_up(max(block_m, 8), 8)

    def _k1_step_bytes(tm):
        return (2 * tm * Kp * in_bytes          # patches tile (double-buffered)
                + 2 * Kp * Np * in_bytes        # resident weight (2 buffers)
                + 2 * tm * TN * slab_bytes      # conv-out tile
                + 2 * 2 * Np * 4)               # stats tile

    while TM > 128 and _k1_step_bytes(TM) > 40 * 1024 * 1024:
        TM //= 2

    Mp = _round_up(M, TM)
    m_tiles = Mp // TM

    patches = patches.reshape(M, K)
    patches = jnp.pad(patches, ((0, Mp - M), (0, Kp - K)))

    w_kc = jnp.transpose(weight_oihw, (2, 3, 1, 0)).reshape(K, Cout)
    w_kc = jnp.pad(w_kc.astype(mxu_dtype), ((0, Kp - K), (0, Np - Cout)))

    # ---- kernel 1: tiled conv-as-matmul + per-tile BN partial sums ----------
    cost1 = pl.CostEstimate(
        flops=2 * Mp * Kp * Np,
        transcendentals=0,
        bytes_accessed=(Mp * Kp + Kp * Np) * in_bytes
                       + Mp * Np * slab_bytes + m_tiles * 2 * Np * 4)

    conv_slab, stats = pl.pallas_call(
        partial(conv_stats_kernel, n_tiles=n_tiles),
        out_shape=(jax.ShapeDtypeStruct((Mp, Np), slab_dtype),
                   jax.ShapeDtypeStruct((m_tiles, 2, Np), jnp.float32)),
        grid=(m_tiles, n_tiles),
        in_specs=[pl.BlockSpec((TM, Kp), lambda i, j: (i, 0)),
                  pl.BlockSpec((Kp, Np), lambda i, j: (0, 0))],   # resident
        out_specs=(pl.BlockSpec((TM, TN), lambda i, j: (i, j)),
                   pl.BlockSpec((1, 2, TN), lambda i, j: (i, 0, j))),
        compiler_params=pltpu.CompilerParams(
            dimension_semantics=("parallel", "parallel"),
            vmem_limit_bytes=_vmem_limit_bytes(_k1_step_bytes(TM))),
        cost_estimate=cost1,
    )(patches, w_kc)

    # ---- close the BatchNorm reduction across all row tiles (tiny) ----------
    # Train-mode biased batch stats over the true N*Ho*Wo rows; padded rows are
    # zero and contribute nothing, padded channels get gamma=beta=0 and are
    # sliced away.  One-pass E[x^2]-E[x]^2 in f32: conv outputs are near-zero
    # mean here, so cancellation is negligible.
    sums = jnp.sum(stats[:, 0, :], axis=0)
    sumsq = jnp.sum(stats[:, 1, :], axis=0)
    mean = sums / M
    var = jnp.maximum(sumsq / M - mean * mean, 0.0)
    inv_std = jax.lax.rsqrt(var + eps)
    gamma_p = jnp.zeros((Np,), jnp.float32).at[:Cout].set(gamma.astype(jnp.float32))
    beta_p = jnp.zeros((Np,), jnp.float32).at[:Cout].set(beta.astype(jnp.float32))
    scale = (gamma_p * inv_std).reshape(1, Np)
    shift = (beta_p - mean * gamma_p * inv_std).reshape(1, Np)

    # ---- kernel 2: BN affine + ReLU, bf16 streaming, in place ---------------
    cost2 = pl.CostEstimate(
        flops=3 * Mp * Np,
        transcendentals=0,
        bytes_accessed=2 * Mp * Np * slab_bytes + 2 * 2 * Np * 4)

    k2_step_bytes = 2 * 2 * TM * TN * slab_bytes + 2 * 2 * TN * 4
    out_slab = pl.pallas_call(
        bn_relu_kernel,
        out_shape=jax.ShapeDtypeStruct((Mp, Np), slab_dtype),
        grid=(m_tiles, n_tiles),
        in_specs=[pl.BlockSpec((TM, TN), lambda i, j: (i, j)),
                  pl.BlockSpec((1, TN), lambda i, j: (0, j)),
                  pl.BlockSpec((1, TN), lambda i, j: (0, j))],
        out_specs=pl.BlockSpec((TM, TN), lambda i, j: (i, j)),
        compiler_params=pltpu.CompilerParams(
            dimension_semantics=("parallel", "parallel"),
            vmem_limit_bytes=_vmem_limit_bytes(k2_step_bytes)),
        cost_estimate=cost2,
        input_output_aliases={0: 0},      # overwrite the conv slab in place
    )(conv_slab, scale, shift)

    out = out_slab[:M, :Cout].astype(jnp.float32).reshape(N, Ho, Wo, Cout)
    return jnp.transpose(out, (0, 3, 1, 2))               # back to NCHW


def _reference(x_nchw, weight_oihw, gamma, beta, eps=1e-5):
    """Pure-JAX reference matching PyTorch Conv2d + BatchNorm2d(train) + ReLU."""
    conv = jax.lax.conv_general_dilated(
        x_nchw, weight_oihw, window_strides=(1, 1), padding=((1, 1), (1, 1)),
        dimension_numbers=("NCHW", "OIHW", "NCHW"))
    mean = conv.mean(axis=(0, 2, 3), keepdims=True)
    var = ((conv - mean) ** 2).mean(axis=(0, 2, 3), keepdims=True)
    y = (conv - mean) * jax.lax.rsqrt(var + eps)
    y = y * gamma.reshape(1, -1, 1, 1) + beta.reshape(1, -1, 1, 1)
    return jnp.maximum(y, 0.0)


if __name__ == "__main__":
    key = jax.random.PRNGKey(0)
    k_x, k_w, k_g, k_b = jax.random.split(key, 4)

    N, Cin, H, W = 2, 4, 16, 16
    Cout, KH, KW = 8, 3, 3

    x = jax.random.normal(k_x, (N, Cin, H, W), dtype=jnp.float32)
    weight = jax.random.normal(k_w, (Cout, Cin, KH, KW), dtype=jnp.float32) * 0.1
    gamma = jax.random.normal(k_g, (Cout,), dtype=jnp.float32) * 0.5 + 1.0
    beta = jax.random.normal(k_b, (Cout,), dtype=jnp.float32) * 0.1

    fwd = jax.jit(conv_bn_relu)
    out = jax.block_until_ready(fwd(x, weight, gamma, beta))

    ref = jax.block_until_ready(_reference(x, weight, gamma, beta))
    assert out.shape == (N, Cout, H, W)
    max_err = float(jnp.max(jnp.abs(out - ref)))
    # Tolerance reflects bf16 MXU operands + the bf16 inter-pass slab (f32
    # accumulation / f32 BN statistics) vs. the pure-f32 reference.
    assert jnp.allclose(out, ref, atol=5e-2, rtol=5e-2), f"max abs err {max_err}"

    print("KERNEL_OK")
</pallas_src>

<mosaic_0001>
module attributes {stable_mosaic.version = 11 : i64} {
  func.func @bn_relu_kernel(%arg0: i32, %arg1: i32, %arg2: memref<512x128xbf16, #tpu.memory_space<vmem>>, %arg3: memref<1x128xf32, #tpu.memory_space<vmem>>, %arg4: memref<1x128xf32, #tpu.memory_space<vmem>>, %arg5: memref<512x128xbf16, #tpu.memory_space<vmem>>) attributes {dimension_semantics = [#tpu.dimension_semantics<parallel>, #tpu.dimension_semantics<parallel>], iteration_bounds = array<i64: 1, 1>, scalar_prefetch = 0 : i64, scratch_operands = 0 : i64, tpu.core_type = #tpu.core_type<tc>, window_params = [{transform_indices = @transform_0, window_bounds = array<i64: 512, 128>}, {transform_indices = @transform_1, window_bounds = array<i64: 1, 128>}, {transform_indices = @transform_2, window_bounds = array<i64: 1, 128>}, {transform_indices = @transform_3, window_bounds = array<i64: 512, 128>}]} {
    %c0 = arith.constant 0 : index
    %c0_0 = arith.constant 0 : index
    %0 = vector.load %arg2[%c0, %c0_0] : memref<512x128xbf16, #tpu.memory_space<vmem>>, vector<512x128xbf16>
    %1 = arith.extf %0 : vector<512x128xbf16> to vector<512x128xf32>
    %c0_1 = arith.constant 0 : index
    %c0_2 = arith.constant 0 : index
    %2 = vector.load %arg3[%c0_1, %c0_2] : memref<1x128xf32, #tpu.memory_space<vmem>>, vector<1x128xf32>
    %3 = vector.broadcast %2 : vector<1x128xf32> to vector<512x128xf32>
    %4 = arith.mulf %1, %3 : vector<512x128xf32>
    %c0_3 = arith.constant 0 : index
    %c0_4 = arith.constant 0 : index
    %5 = vector.load %arg4[%c0_3, %c0_4] : memref<1x128xf32, #tpu.memory_space<vmem>>, vector<1x128xf32>
    %6 = vector.broadcast %5 : vector<1x128xf32> to vector<512x128xf32>
    %7 = arith.addf %4, %6 : vector<512x128xf32>
    %cst = arith.constant 0.000000e+00 : f32
    %8 = vector.broadcast %cst : f32 to vector<512x128xf32>
    %9 = arith.maximumf %7, %8 : vector<512x128xf32>
    %10 = arith.truncf %9 : vector<512x128xf32> to vector<512x128xbf16>
    %c0_5 = arith.constant 0 : index
    %c0_6 = arith.constant 0 : index
    %11 = vector.load %arg5[%c0_5, %c0_6] : memref<512x128xbf16, #tpu.memory_space<vmem>>, vector<512x128xbf16>
    tpu.vector_store %arg5[%c0_5, %c0_6], %10 {strides = array<i32>} : memref<512x128xbf16, #tpu.memory_space<vmem>>, vector<512x128xbf16>,
    return
  }
  func.func @transform_0(%arg0: i32, %arg1: i32) -> (i32, i32) {
    %c0_i32 = arith.constant 0 : i32
    return %arg0, %arg1 : i32, i32
  }
  func.func @transform_1(%arg0: i32, %arg1: i32) -> (i32, i32) {
    %c0_i32 = arith.constant 0 : i32
    %c0_i32_0 = arith.constant 0 : i32
    return %c0_i32, %arg1 : i32, i32
  }
  func.func @transform_2(%arg0: i32, %arg1: i32) -> (i32, i32) {
    %c0_i32 = arith.constant 0 : i32
    %c0_i32_0 = arith.constant 0 : i32
    return %c0_i32, %arg1 : i32, i32
  }
  func.func @transform_3(%arg0: i32, %arg1: i32) -> (i32, i32) {
    %c0_i32 = arith.constant 0 : i32
    return %arg0, %arg1 : i32, i32
  }
}

module attributes {stable_mosaic.version = 11 : i64} {
  func.func @conv_stats_kernel(%arg0: i32, %arg1: i32, %arg2: memref<512x36xbf16, #tpu.memory_space<vmem>>, %arg3: memref<36x128xbf16, #tpu.memory_space<vmem>>, %arg4: memref<512x128xbf16, #tpu.memory_space<vmem>>, %arg5: memref<1x2x128xf32, #tpu.memory_space<vmem>>) attributes {dimension_semantics = [#tpu.dimension_semantics<parallel>, #tpu.dimension_semantics<parallel>], iteration_bounds = array<i64: 1, 1>, scalar_prefetch = 0 : i64, scratch_operands = 0 : i64, tpu.core_type = #tpu.core_type<tc>, window_params = [{transform_indices = @transform_0, window_bounds = array<i64: 512, 36>}, {pipeline_mode = #tpu.pipeline_mode<synchronous>, transform_indices = @transform_1, window_bounds = array<i64: 36, 128>}, {transform_indices = @transform_2, window_bounds = array<i64: 512, 128>}, {transform_indices = @transform_3, window_bounds = array<i64: 1, 2, 128>}]} {
    %c0 = arith.constant 0 : index
    %c0_0 = arith.constant 0 : index
    %0 = vector.load %arg3[%c0, %c0_0] : memref<36x128xbf16, #tpu.memory_space<vmem>>, vector<36x128xbf16>
    %c0_1 = arith.constant 0 : index
    %c0_2 = arith.constant 0 : index
    %1 = vector.load %arg2[%c0_1, %c0_2] : memref<512x36xbf16, #tpu.memory_space<vmem>>, vector<512x36xbf16>
    %cst = arith.constant dense<0.000000e+00> : vector<512x128xf32>
    %2 = tpu.matmul %1, %0, %cst {dimension_numbers = #tpu.dot_dimension_numbers<[1], [0], [0], [1], [0, 0, 1, 1], [], []>} : vector<512x36xbf16>, vector<36x128xbf16>, vector<512x128xf32> -> vector<512x128xf32>
    %3 = arith.truncf %2 : vector<512x128xf32> to vector<512x128xbf16>
    %c0_3 = arith.constant 0 : index
    %c0_4 = arith.constant 0 : index
    %4 = vector.load %arg4[%c0_3, %c0_4] : memref<512x128xbf16, #tpu.memory_space<vmem>>, vector<512x128xbf16>
    tpu.vector_store %arg4[%c0_3, %c0_4], %3 {strides = array<i32>} : memref<512x128xbf16, #tpu.memory_space<vmem>>, vector<512x128xbf16>,
    %cst_5 = arith.constant dense<0.000000e+00> : vector<128xf32>
    %5 = vector.multi_reduction <add>, %2, %cst_5 [0] : vector<512x128xf32> to vector<128xf32>
    %6 = vector.shape_cast %5 : vector<128xf32> to vector<1x128xf32>
    %c0_6 = arith.constant 0 : index
    %c0_7 = arith.constant 0 : index
    %c0_8 = arith.constant 0 : index
    %7 = vector.load %arg5[%c0_6, %c0_7, %c0_8] : memref<1x2x128xf32, #tpu.memory_space<vmem>>, vector<1x1x128xf32>
    %8 = vector.shape_cast %7 : vector<1x1x128xf32> to vector<1x128xf32>
    %9 = vector.shape_cast %6 : vector<1x128xf32> to vector<1x1x128xf32>
    tpu.vector_store %arg5[%c0_6, %c0_7, %c0_8], %9 {strides = array<i32>} : memref<1x2x128xf32, #tpu.memory_space<vmem>>, vector<1x1x128xf32>,
    %10 = arith.mulf %2, %2 : vector<512x128xf32>
    %cst_9 = arith.constant dense<0.000000e+00> : vector<128xf32>
    %11 = vector.multi_reduction <add>, %10, %cst_9 [0] : vector<512x128xf32> to vector<128xf32>
    %12 = vector.shape_cast %11 : vector<128xf32> to vector<1x128xf32>
    %c0_10 = arith.constant 0 : index
    %c1 = arith.constant 1 : index
    %c0_11 = arith.constant 0 : index
    %13 = vector.load %arg5[%c0_10, %c1, %c0_11] : memref<1x2x128xf32, #tpu.memory_space<vmem>>, vector<1x1x128xf32>
    %14 = vector.shape_cast %13 : vector<1x1x128xf32> to vector<1x128xf32>
    %15 = vector.shape_cast %12 : vector<1x128xf32> to vector<1x1x128xf32>
    tpu.vector_store %arg5[%c0_10, %c1, %c0_11], %15 {strides = array<i32>} : memref<1x2x128xf32, #tpu.memory_space<vmem>>, vector<1x1x128xf32>,
    return
  }
  func.func @transform_0(%arg0: i32, %arg1: i32) -> (i32, i32) {
    %c0_i32 = arith.constant 0 : i32
    %c0_i32_0 = arith.constant 0 : i32
    return %arg0, %c0_i32 : i32, i32
  }
  func.func @transform_1(%arg0: i32, %arg1: i32) -> (i32, i32) {
    %c0_i32 = arith.constant 0 : i32
    %c0_i32_0 = arith.constant 0 : i32
    %c0_i32_1 = arith.constant 0 : i32
    return %c0_i32, %c0_i32_0 : i32, i32
  }
  func.func @transform_2(%arg0: i32, %arg1: i32) -> (i32, i32) {
    %c0_i32 = arith.constant 0 : i32
    return %arg0, %arg1 : i32, i32
  }
  func.func @transform_3(%arg0: i32, %arg1: i32) -> (i32, i32, i32) {
    %c0_i32 = arith.constant 0 : i32
    %c0_i32_0 = arith.constant 0 : i32
    return %arg0, %c0_i32, %arg1 : i32, i32, i32
  }
}

</mosaic_0001>

<llo_original>
// kernel: conv_bn_relu.3
$region0: #{conv_bn_relu.3}
  #allocation0 [shape = 'u32[]', space=smem, size = 0x4, offset = 0x4, fixed_abs, tag = 'smem constant byte address 0x4 - core index']
  #allocation1 [shape = 'u32[72,128]{1,0:T(1,128)}', space=vmem, size = 0x9000, scoped, tag = 'internal scratch']
  %s0 = inlined_call_operand.vmem [shape: bf16[512,128], index: 0, kind: input, shape index: {}, may-alias: {0,3}]
  %s1 = inlined_call_operand.vmem [shape: f32[1,128], index: 1, kind: input, shape index: {}]
  %s2 = inlined_call_operand.vmem [shape: f32[1,128], index: 2, kind: input, shape index: {}]
  %s3 = inlined_call_operand.vmem [shape: bf16[512,128], index: 3, kind: output, shape index: {}, may-alias: {0,3}]
  %s4 = sld [smem:[#allocation0]]
  $region22: #{conv_bn_relu.3} parent=0
    _
  %s6 = ssub.s32 1, %s4
  %s7 = scalar_select 0, %s6, %s4
  // Predicated region
  $region2: #{conv_bn_relu.3} parent=0 // pred_check
    _
  $region3: #{conv_bn_relu.3} parent=0 // pred_check_branch
    %9 = sbr.rel (0) target = $region5
  $region4: #{conv_bn_relu.3} parent=0 // pred_region
    _
  $region5: #{conv_bn_relu.3} parent=0 // pred_fallthru
    _
  // Predicated region
  $region6: #{conv_bn_relu.3} parent=0 // pred_check
    _
  $region7: #{conv_bn_relu.3} parent=0 // pred_check_branch
    %11 = sbr.rel (0) target = $region9
  $region8: #{conv_bn_relu.3} parent=0 // pred_region
    _
  $region9: #{conv_bn_relu.3} parent=0 // pred_fallthru
    _
  // Predicated region
  $region10: #{conv_bn_relu.3} parent=0 // pred_check
    _
  $region11: #{conv_bn_relu.3} parent=0 // pred_check_branch
    %13 = sbr.rel (0) target = $region13
  $region12: #{conv_bn_relu.3} parent=0 // pred_region
    _
  $region13: #{conv_bn_relu.3} parent=0 // pred_fallthru
    _
  %v14 = vld [vmem:[%s0] sm:$0xf]
  %v15 = vld [vmem:[%s0 + $0x4] sm:$0xf]
  %v16 = vld [vmem:[%s0 + $0x8] sm:$0xf]
  %v17 = vld [vmem:[%s0 + $0xc] sm:$0xf]
  %v18 = vld [vmem:[%s0 + $0x10] sm:$0xf]
  %v19 = vld [vmem:[%s0 + $0x14] sm:$0xf]
  %v20 = vld [vmem:[%s0 + $0x18] sm:$0xf]
  %v21 = vld [vmem:[%s0 + $0x1c] sm:$0xf]
  %v22 = vld [vmem:[%s0 + $0x20] sm:$0xf]
  %v23 = vld [vmem:[%s0 + $0x24] sm:$0xf]
  %v24 = vld [vmem:[%s0 + $0x28] sm:$0xf]
  %v25 = vld [vmem:[%s0 + $0x2c] sm:$0xf]
  %v26 = vld [vmem:[%s0 + $0x30] sm:$0xf]
  %v27 = vld [vmem:[%s0 + $0x34] sm:$0xf]
  %v28 = vld [vmem:[%s0 + $0x38] sm:$0xf]
  %v29 = vld [vmem:[%s0 + $0x3c] sm:$0xf]
  %v30 = vld [vmem:[%s0 + $0x40] sm:$0xf]
  %v31 = vld [vmem:[%s0 + $0x44] sm:$0xf]
  %v32 = vld [vmem:[%s0 + $0x48] sm:$0xf]
  %v33 = vld [vmem:[%s0 + $0x4c] sm:$0xf]
  %v34 = vld [vmem:[%s0 + $0x50] sm:$0xf]
  %v35 = vld [vmem:[%s0 + $0x54] sm:$0xf]
  %v36 = vld [vmem:[%s0 + $0x58] sm:$0xf]
  %v37 = vld [vmem:[%s0 + $0x5c] sm:$0xf]
  %v38 = vld [vmem:[%s0 + $0x60] sm:$0xf]
  %v39 = vld [vmem:[%s0 + $0x64] sm:$0xf]
  %v40 = vld [vmem:[%s0 + $0x68] sm:$0xf]
  %v41 = vld [vmem:[%s0 + $0x6c] sm:$0xf]
  %v42 = vld [vmem:[%s0 + $0x70] sm:$0xf]
  %v43 = vld [vmem:[%s0 + $0x74] sm:$0xf]
  %v44 = vld [vmem:[%s0 + $0x78] sm:$0xf]
  %v45 = vld [vmem:[%s0 + $0x7c] sm:$0xf]
  %v46 = vld [vmem:[%s0 + $0x80] sm:$0xf]
  %v47 = vld [vmem:[%s0 + $0x84] sm:$0xf]
  %v48 = vld [vmem:[%s0 + $0x88] sm:$0xf]
  %v49 = vld [vmem:[%s0 + $0x8c] sm:$0xf]
  %v50 = vld [vmem:[%s0 + $0x90] sm:$0xf]
  %v51 = vld [vmem:[%s0 + $0x94] sm:$0xf]
  %v52 = vld [vmem:[%s0 + $0x98] sm:$0xf]
  %v53 = vld [vmem:[%s0 + $0x9c] sm:$0xf]
  %v54 = vld [vmem:[%s0 + $0xa0] sm:$0xf]
  %v55 = vld [vmem:[%s0 + $0xa4] sm:$0xf]
  %v56 = vld [vmem:[%s0 + $0xa8] sm:$0xf]
  %v57 = vld [vmem:[%s0 + $0xac] sm:$0xf]
  %v58 = vld [vmem:[%s0 + $0xb0] sm:$0xf]
  %v59 = vld [vmem:[%s0 + $0xb4] sm:$0xf]
  %v60 = vld [vmem:[%s0 + $0xb8] sm:$0xf]
  %v61 = vld [vmem:[%s0 + $0xbc] sm:$0xf]
  %v62 = vld [vmem:[%s0 + $0xc0] sm:$0xf]
  %v63 = vld [vmem:[%s0 + $0xc4] sm:$0xf]
  %v64 = vld [vmem:[%s0 + $0xc8] sm:$0xf]
  %v65 = vld [vmem:[%s0 + $0xcc] sm:$0xf]
  %v66 = vld [vmem:[%s0 + $0xd0] sm:$0xf]
  %v67 = vld [vmem:[%s0 + $0xd4] sm:$0xf]
  %v68 = vld [vmem:[%s0 + $0xd8] sm:$0xf]
  %v69 = vld [vmem:[%s0 + $0xdc] sm:$0xf]
  %v70 = vld [vmem:[%s0 + $0xe0] sm:$0xf]
  %v71 = vld [vmem:[%s0 + $0xe4] sm:$0xf]
  %v72 = vld [vmem:[%s0 + $0xe8] sm:$0xf]
  %v73 = vld [vmem:[%s0 + $0xec] sm:$0xf]
  %v74 = vld [vmem:[%s0 + $0xf0] sm:$0xf]
  %v75 = vld [vmem:[%s0 + $0xf4] sm:$0xf]
  %v76 = vld [vmem:[%s0 + $0xf8] sm:$0xf]
  %v77 = vld [vmem:[%s0 + $0xfc] sm:$0xf]
  %v78 = vunpack.c.l.bf16 %v14
  %v79 = vunpack.c.l.bf16 %v15
  %v80 = vunpack.c.l.bf16 %v16
  %v81 = vunpack.c.l.bf16 %v17
  %v82 = vunpack.c.l.bf16 %v18
  %v83 = vunpack.c.l.bf16 %v19
  %v84 = vunpack.c.l.bf16 %v20
  %v85 = vunpack.c.l.bf16 %v21
  %v86 = vunpack.c.l.bf16 %v22
  %v87 = vunpack.c.l.bf16 %v23
  %v88 = vunpack.c.l.bf16 %v24
  %v89 = vunpack.c.l.bf16 %v25
  %v90 = vunpack.c.l.bf16 %v26
  %v91 = vunpack.c.l.bf16 %v27
  %v92 = vunpack.c.l.bf16 %v28
  %v93 = vunpack.c.l.bf16 %v29
  %v94 = vunpack.c.l.bf16 %v30
  %v95 = vunpack.c.l.bf16 %v31
  %v96 = vunpack.c.l.bf16 %v32
  %v97 = vunpack.c.l.bf16 %v33
  %v98 = vunpack.c.l.bf16 %v34
  %v99 = vunpack.c.l.bf16 %v35
  %v100 = vunpack.c.l.bf16 %v36
  %v101 = vunpack.c.l.bf16 %v37
  %v102 = vunpack.c.l.bf16 %v38
  %v103 = vunpack.c.l.bf16 %v39
  %v104 = vunpack.c.l.bf16 %v40
  %v105 = vunpack.c.l.bf16 %v41
  %v106 = vunpack.c.l.bf16 %v42
  %v107 = vunpack.c.l.bf16 %v43
  %v108 = vunpack.c.l.bf16 %v44
  %v109 = vunpack.c.l.bf16 %v45
  %v110 = vunpack.c.l.bf16 %v46
  %v111 = vunpack.c.l.bf16 %v47
  %v112 = vunpack.c.l.bf16 %v48
  %v113 = vunpack.c.l.bf16 %v49
  %v114 = vunpack.c.l.bf16 %v50
  %v115 = vunpack.c.l.bf16 %v51
  %v116 = vunpack.c.l.bf16 %v52
  %v117 = vunpack.c.l.bf16 %v53
  %v118 = vunpack.c.l.bf16 %v54
  %v119 = vunpack.c.l.bf16 %v55
  %v120 = vunpack.c.l.bf16 %v56
  %v121 = vunpack.c.l.bf16 %v57
  %v122 = vunpack.c.l.bf16 %v58
  %v123 = vunpack.c.l.bf16 %v59
  %v124 = vunpack.c.l.bf16 %v60
  %v125 = vunpack.c.l.bf16 %v61
  %v126 = vunpack.c.l.bf16 %v62
  %v127 = vunpack.c.l.bf16 %v63
  %v128 = vunpack.c.l.bf16 %v64
  %v129 = vunpack.c.l.bf16 %v65
  %v130 = vunpack.c.l.bf16 %v66
  %v131 = vunpack.c.l.bf16 %v67
  %v132 = vunpack.c.l.bf16 %v68
  %v133 = vunpack.c.l.bf16 %v69
  %v134 = vunpack.c.l.bf16 %v70
  %v135 = vunpack.c.l.bf16 %v71
  %v136 = vunpack.c.l.bf16 %v72
  %v137 = vunpack.c.l.bf16 %v73
  %v138 = vunpack.c.l.bf16 %v74
  %v139 = vunpack.c.l.bf16 %v75
  %v140 = vunpack.c.l.bf16 %v76
  %v141 = vunpack.c.l.bf16 %v77
  %v142 = vld [vmem:[%s1] sm:$0x1]
  %v144 = vperm.slane %v142, 0
  %v146 = vmul.f32 %v78, %v144
  %v147 = vmul.f32 %v79, %v144
  %v148 = vmul.f32 %v80, %v144
  %v149 = vmul.f32 %v81, %v144
  %v150 = vmul.f32 %v82, %v144
  %v151 = vmul.f32 %v83, %v144
  %v152 = vmul.f32 %v84, %v144
  %v153 = vmul.f32 %v85, %v144
  %v154 = vmul.f32 %v86, %v144
  %v155 = vmul.f32 %v87, %v144
  %v156 = vmul.f32 %v88, %v144
  %v157 = vmul.f32 %v89, %v144
  %v158 = vmul.f32 %v90, %v144
  %v159 = vmul.f32 %v91, %v144
  %v160 = vmul.f32 %v92, %v144
  %v161 = vmul.f32 %v93, %v144
  %v162 = vmul.f32 %v94, %v144
  %v163 = vmul.f32 %v95, %v144
  %v164 = vmul.f32 %v96, %v144
  %v165 = vmul.f32 %v97, %v144
  %v166 = vmul.f32 %v98, %v144
  %v167 = vmul.f32 %v99, %v144
  %v168 = vmul.f32 %v100, %v144
  %v169 = vmul.f32 %v101, %v144
  %v170 = vmul.f32 %v102, %v144
  %v171 = vmul.f32 %v103, %v144
  %v172 = vmul.f32 %v104, %v144
  %v173 = vmul.f32 %v105, %v144
  %v174 = vmul.f32 %v106, %v144
  %v175 = vmul.f32 %v107, %v144
  %v176 = vmul.f32 %v108, %v144
  %v177 = vmul.f32 %v109, %v144
  %v178 = vmul.f32 %v110, %v144
  %v179 = vmul.f32 %v111, %v144
  %v180 = vmul.f32 %v112, %v144
  %v181 = vmul.f32 %v113, %v144
  %v182 = vmul.f32 %v114, %v144
  %v183 = vmul.f32 %v115, %v144
  %v184 = vmul.f32 %v116, %v144
  %v185 = vmul.f32 %v117, %v144
  %v186 = vmul.f32 %v118, %v144
  %v187 = vmul.f32 %v119, %v144
  %v188 = vmul.f32 %v120, %v144
  %v189 = vmul.f32 %v121, %v144
  %v190 = vmul.f32 %v122, %v144
  %v191 = vmul.f32 %v123, %v144
  %v192 = vmul.f32 %v124, %v144
  %v193 = vmul.f32 %v125, %v144
  %v194 = vmul.f32 %v126, %v144
  %v195 = vmul.f32 %v127, %v144
  %v196 = vmul.f32 %v128, %v144
  %v197 = vmul.f32 %v129, %v144
  %v198 = vmul.f32 %v130, %v144
  %v199 = vmul.f32 %v131, %v144
  %v200 = vmul.f32 %v132, %v144
  %v201 = vmul.f32 %v133, %v144
  %v202 = vmul.f32 %v134, %v144
  %v203 = vmul.f32 %v135, %v144
  %v204 = vmul.f32 %v136, %v144
  %v205 = vmul.f32 %v137, %v144
  %v206 = vmul.f32 %v138, %v144
  %v207 = vmul.f32 %v139, %v144
  %v208 = vmul.f32 %v140, %v144
  %v209 = vmul.f32 %v141, %v144
  %v210 = vld [vmem:[%s2] sm:$0x1]
  %v212 = vperm.slane %v210, 0
  %v214 = vadd.f32 %v146, %v212
  %v215 = vadd.f32 %v147, %v212
  %v216 = vadd.f32 %v148, %v212
  %v217 = vadd.f32 %v149, %v212
  %v218 = vadd.f32 %v150, %v212
  %v219 = vadd.f32 %v151, %v212
  %v220 = vadd.f32 %v152, %v212
  %v221 = vadd.f32 %v153, %v212
  %v222 = vadd.f32 %v154, %v212
  %v223 = vadd.f32 %v155, %v212
  %v224 = vadd.f32 %v156, %v212
  %v225 = vadd.f32 %v157, %v212
  %v226 = vadd.f32 %v158, %v212
  %v227 = vadd.f32 %v159, %v212
  %v228 = vadd.f32 %v160, %v212
  %v229 = vadd.f32 %v161, %v212
  %v230 = vadd.f32 %v162, %v212
  %v231 = vadd.f32 %v163, %v212
  %v232 = vadd.f32 %v164, %v212
  %v233 = vadd.f32 %v165, %v212
  %v234 = vadd.f32 %v166, %v212
  %v235 = vadd.f32 %v167, %v212
  %v236 = vadd.f32 %v168, %v212
  %v237 = vadd.f32 %v169, %v212
  %v238 = vadd.f32 %v170, %v212
  %v239 = vadd.f32 %v171, %v212
  %v240 = vadd.f32 %v172, %v212
  %v241 = vadd.f32 %v173, %v212
  %v242 = vadd.f32 %v174, %v212
  %v243 = vadd.f32 %v175, %v212
  %v244 = vadd.f32 %v176, %v212
  %v245 = vadd.f32 %v177, %v212
  %v246 = vadd.f32 %v178, %v212
  %v247 = vadd.f32 %v179, %v212
  %v248 = vadd.f32 %v180, %v212
  %v249 = vadd.f32 %v181, %v212
  %v250 = vadd.f32 %v182, %v212
  %v251 = vadd.f32 %v183, %v212
  %v252 = vadd.f32 %v184, %v212
  %v253 = vadd.f32 %v185, %v212
  %v254 = vadd.f32 %v186, %v212
  %v255 = vadd.f32 %v187, %v212
  %v256 = vadd.f32 %v188, %v212
  %v257 = vadd.f32 %v189, %v212
  %v258 = vadd.f32 %v190, %v212
  %v259 = vadd.f32 %v191, %v212
  %v260 = vadd.f32 %v192, %v212
  %v261 = vadd.f32 %v193, %v212
  %v262 = vadd.f32 %v194, %v212
  %v263 = vadd.f32 %v195, %v212
  %v264 = vadd.f32 %v196, %v212
  %v265 = vadd.f32 %v197, %v212
  %v266 = vadd.f32 %v198, %v212
  %v267 = vadd.f32 %v199, %v212
  %v268 = vadd.f32 %v200, %v212
  %v269 = vadd.f32 %v201, %v212
  %v270 = vadd.f32 %v202, %v212
  %v271 = vadd.f32 %v203, %v212
  %v272 = vadd.f32 %v204, %v212
  %v273 = vadd.f32 %v205, %v212
  %v274 = vadd.f32 %v206, %v212
  %v275 = vadd.f32 %v207, %v212
  %v276 = vadd.f32 %v208, %v212
  %v277 = vadd.f32 %v209, %v212
  %v278 = vmax.f32 %v214, 0.0
  %v279 = vmax.f32 %v215, 0.0
  %v280 = vmax.f32 %v216, 0.0
  %v281 = vmax.f32 %v217, 0.0
  %v282 = vmax.f32 %v218, 0.0
  %v283 = vmax.f32 %v219, 0.0
  %v284 = vmax.f32 %v220, 0.0
  %v285 = vmax.f32 %v221, 0.0
  %v286 = vmax.f32 %v222, 0.0
  %v287 = vmax.f32 %v223, 0.0
  %v288 = vmax.f32 %v224, 0.0
  %v289 = vmax.f32 %v225, 0.0
  %v290 = vmax.f32 %v226, 0.0
  %v291 = vmax.f32 %v227, 0.0
  %v292 = vmax.f32 %v228, 0.0
  %v293 = vmax.f32 %v229, 0.0
  %v294 = vmax.f32 %v230, 0.0
  %v295 = vmax.f32 %v231, 0.0
  %v296 = vmax.f32 %v232, 0.0
  %v297 = vmax.f32 %v233, 0.0
  %v298 = vmax.f32 %v234, 0.0
  %v299 = vmax.f32 %v235, 0.0
  %v300 = vmax.f32 %v236, 0.0
  %v301 = vmax.f32 %v237, 0.0
  %v302 = vmax.f32 %v238, 0.0
  %v303 = vmax.f32 %v239, 0.0
  %v304 = vmax.f32 %v240, 0.0
  %v305 = vmax.f32 %v241, 0.0
  %v306 = vmax.f32 %v242, 0.0
  %v307 = vmax.f32 %v243, 0.0
  %v308 = vmax.f32 %v244, 0.0
  %v309 = vmax.f32 %v245, 0.0
  %v310 = vmax.f32 %v246, 0.0
  %v311 = vmax.f32 %v247, 0.0
  %v312 = vmax.f32 %v248, 0.0
  %v313 = vmax.f32 %v249, 0.0
  %v314 = vmax.f32 %v250, 0.0
  %v315 = vmax.f32 %v251, 0.0
  %v316 = vmax.f32 %v252, 0.0
  %v317 = vmax.f32 %v253, 0.0
  %v318 = vmax.f32 %v254, 0.0
  %v319 = vmax.f32 %v255, 0.0
  %v320 = vmax.f32 %v256, 0.0
  %v321 = vmax.f32 %v257, 0.0
  %v322 = vmax.f32 %v258, 0.0
  %v323 = vmax.f32 %v259, 0.0
  %v324 = vmax.f32 %v260, 0.0
  %v325 = vmax.f32 %v261, 0.0
  %v326 = vmax.f32 %v262, 0.0
  %v327 = vmax.f32 %v263, 0.0
  %v328 = vmax.f32 %v264, 0.0
  %v329 = vmax.f32 %v265, 0.0
  %v330 = vmax.f32 %v266, 0.0
  %v331 = vmax.f32 %v267, 0.0
  %v332 = vmax.f32 %v268, 0.0
  %v333 = vmax.f32 %v269, 0.0
  %v334 = vmax.f32 %v270, 0.0
  %v335 = vmax.f32 %v271, 0.0
  %v336 = vmax.f32 %v272, 0.0
  %v337 = vmax.f32 %v273, 0.0
  %v338 = vmax.f32 %v274, 0.0
  %v339 = vmax.f32 %v275, 0.0
  %v340 = vmax.f32 %v276, 0.0
  %v341 = vmax.f32 %v277, 0.0
  %v342 = vpack.c.bf16 %v278, %v278
  %v343 = vpack.c.bf16 %v279, %v279
  %v344 = vpack.c.bf16 %v280, %v280
  %v345 = vpack.c.bf16 %v281, %v281
  %v346 = vpack.c.bf16 %v282, %v282
  %v347 = vpack.c.bf16 %v283, %v283
  %v348 = vpack.c.bf16 %v284, %v284
  %v349 = vpack.c.bf16 %v285, %v285
  %v350 = vpack.c.bf16 %v286, %v286
  %v351 = vpack.c.bf16 %v287, %v287
  %v352 = vpack.c.bf16 %v288, %v288
  %v353 = vpack.c.bf16 %v289, %v289
  %v354 = vpack.c.bf16 %v290, %v290
  %v355 = vpack.c.bf16 %v291, %v291
  %v356 = vpack.c.bf16 %v292, %v292
  %v357 = vpack.c.bf16 %v293, %v293
  %v358 = vpack.c.bf16 %v294, %v294
  %v359 = vpack.c.bf16 %v295, %v295
  %v360 = vpack.c.bf16 %v296, %v296
  %v361 = vpack.c.bf16 %v297, %v297
  %v362 = vpack.c.bf16 %v298, %v298
  %v363 = vpack.c.bf16 %v299, %v299
  %v364 = vpack.c.bf16 %v300, %v300
  %v365 = vpack.c.bf16 %v301, %v301
  %v366 = vpack.c.bf16 %v302, %v302
  %v367 = vpack.c.bf16 %v303, %v303
  %v368 = vpack.c.bf16 %v304, %v304
  %v369 = vpack.c.bf16 %v305, %v305
  %v370 = vpack.c.bf16 %v306, %v306
  %v371 = vpack.c.bf16 %v307, %v307
  %v372 = vpack.c.bf16 %v308, %v308
  %v373 = vpack.c.bf16 %v309, %v309
  %v374 = vpack.c.bf16 %v310, %v310
  %v375 = vpack.c.bf16 %v311, %v311
  %v376 = vpack.c.bf16 %v312, %v312
  %v377 = vpack.c.bf16 %v313, %v313
  %v378 = vpack.c.bf16 %v314, %v314
  %v379 = vpack.c.bf16 %v315, %v315
  %v380 = vpack.c.bf16 %v316, %v316
  %v381 = vpack.c.bf16 %v317, %v317
  %v382 = vpack.c.bf16 %v318, %v318
  %v383 = vpack.c.bf16 %v319, %v319
  %v384 = vpack.c.bf16 %v320, %v320
  %v385 = vpack.c.bf16 %v321, %v321
  %v386 = vpack.c.bf16 %v322, %v322
  %v387 = vpack.c.bf16 %v323, %v323
  %v388 = vpack.c.bf16 %v324, %v324
  %v389 = vpack.c.bf16 %v325, %v325
  %v390 = vpack.c.bf16 %v326, %v326
  %v391 = vpack.c.bf16 %v327, %v327
  %v392 = vpack.c.bf16 %v328, %v328
  %v393 = vpack.c.bf16 %v329, %v329
  %v394 = vpack.c.bf16 %v330, %v330
  %v395 = vpack.c.bf16 %v331, %v331
  %v396 = vpack.c.bf16 %v332, %v332
  %v397 = vpack.c.bf16 %v333, %v333
  %v398 = vpack.c.bf16 %v334, %v334
  %v399 = vpack.c.bf16 %v335, %v335
  %v400 = vpack.c.bf16 %v336, %v336
  %v401 = vpack.c.bf16 %v337, %v337
  %v402 = vpack.c.bf16 %v338, %v338
  %v403 = vpack.c.bf16 %v339, %v339
  %v404 = vpack.c.bf16 %v340, %v340
  %v405 = vpack.c.bf16 %v341, %v341
  %406 = vst [vmem:[%s3] sm:$0xf] %v342
  %407 = vst [vmem:[%s3 + $0x4] sm:$0xf] %v343
  %408 = vst [vmem:[%s3 + $0x8] sm:$0xf] %v344
  %409 = vst [vmem:[%s3 + $0xc] sm:$0xf] %v345
  %410 = vst [vmem:[%s3 + $0x10] sm:$0xf] %v346
  %411 = vst [vmem:[%s3 + $0x14] sm:$0xf] %v347
  %412 = vst [vmem:[%s3 + $0x18] sm:$0xf] %v348
  %413 = vst [vmem:[%s3 + $0x1c] sm:$0xf] %v349
  %414 = vst [vmem:[%s3 + $0x20] sm:$0xf] %v350
  %415 = vst [vmem:[%s3 + $0x24] sm:$0xf] %v351
  %416 = vst [vmem:[%s3 + $0x28] sm:$0xf] %v352
  %417 = vst [vmem:[%s3 + $0x2c] sm:$0xf] %v353
  %418 = vst [vmem:[%s3 + $0x30] sm:$0xf] %v354
  %419 = vst [vmem:[%s3 + $0x34] sm:$0xf] %v355
  %420 = vst [vmem:[%s3 + $0x38] sm:$0xf] %v356
  %421 = vst [vmem:[%s3 + $0x3c] sm:$0xf] %v357
  %422 = vst [vmem:[%s3 + $0x40] sm:$0xf] %v358
  %423 = vst [vmem:[%s3 + $0x44] sm:$0xf] %v359
  %424 = vst [vmem:[%s3 + $0x48] sm:$0xf] %v360
  %425 = vst [vmem:[%s3 + $0x4c] sm:$0xf] %v361
  %426 = vst [vmem:[%s3 + $0x50] sm:$0xf] %v362
  %427 = vst [vmem:[%s3 + $0x54] sm:$0xf] %v363
  %428 = vst [vmem:[%s3 + $0x58] sm:$0xf] %v364
  %429 = vst [vmem:[%s3 + $0x5c] sm:$0xf] %v365
  %430 = vst [vmem:[%s3 + $0x60] sm:$0xf] %v366
  %431 = vst [vmem:[%s3 + $0x64] sm:$0xf] %v367
  %432 = vst [vmem:[%s3 + $0x68] sm:$0xf] %v368
  %433 = vst [vmem:[%s3 + $0x6c] sm:$0xf] %v369
  %434 = vst [vmem:[%s3 + $0x70] sm:$0xf] %v370
  %435 = vst [vmem:[%s3 + $0x74] sm:$0xf] %v371
  %436 = vst [vmem:[%s3 + $0x78] sm:$0xf] %v372
  %437 = vst [vmem:[%s3 + $0x7c] sm:$0xf] %v373
  %438 = vst [vmem:[%s3 + $0x80] sm:$0xf] %v374
  %439 = vst [vmem:[%s3 + $0x84] sm:$0xf] %v375
  %440 = vst [vmem:[%s3 + $0x88] sm:$0xf] %v376
  %441 = vst [vmem:[%s3 + $0x8c] sm:$0xf] %v377
  %442 = vst [vmem:[%s3 + $0x90] sm:$0xf] %v378
  %443 = vst [vmem:[%s3 + $0x94] sm:$0xf] %v379
  %444 = vst [vmem:[%s3 + $0x98] sm:$0xf] %v380
  %445 = vst [vmem:[%s3 + $0x9c] sm:$0xf] %v381
  %446 = vst [vmem:[%s3 + $0xa0] sm:$0xf] %v382
  %447 = vst [vmem:[%s3 + $0xa4] sm:$0xf] %v383
  %448 = vst [vmem:[%s3 + $0xa8] sm:$0xf] %v384
  %449 = vst [vmem:[%s3 + $0xac] sm:$0xf] %v385
  %450 = vst [vmem:[%s3 + $0xb0] sm:$0xf] %v386
  %451 = vst [vmem:[%s3 + $0xb4] sm:$0xf] %v387
  %452 = vst [vmem:[%s3 + $0xb8] sm:$0xf] %v388
  %453 = vst [vmem:[%s3 + $0xbc] sm:$0xf] %v389
  %454 = vst [vmem:[%s3 + $0xc0] sm:$0xf] %v390
  %455 = vst [vmem:[%s3 + $0xc4] sm:$0xf] %v391
  %456 = vst [vmem:[%s3 + $0xc8] sm:$0xf] %v392
  %457 = vst [vmem:[%s3 + $0xcc] sm:$0xf] %v393
  %458 = vst [vmem:[%s3 + $0xd0] sm:$0xf] %v394
  %459 = vst [vmem:[%s3 + $0xd4] sm:$0xf] %v395
  %460 = vst [vmem:[%s3 + $0xd8] sm:$0xf] %v396
  %461 = vst [vmem:[%s3 + $0xdc] sm:$0xf] %v397
  %462 = vst [vmem:[%s3 + $0xe0] sm:$0xf] %v398
  %463 = vst [vmem:[%s3 + $0xe4] sm:$0xf] %v399
  %464 = vst [vmem:[%s3 + $0xe8] sm:$0xf] %v400
  %465 = vst [vmem:[%s3 + $0xec] sm:$0xf] %v401
  %466 = vst [vmem:[%s3 + $0xf0] sm:$0xf] %v402
  %467 = vst [vmem:[%s3 + $0xf4] sm:$0xf] %v403
  %468 = vst [vmem:[%s3 + $0xf8] sm:$0xf] %v404
  %469 = vst [vmem:[%s3 + $0xfc] sm:$0xf] %v405
  // Predicated region
  $region14: #{conv_bn_relu.3} parent=0 // pred_check
    _
  $region15: #{conv_bn_relu.3} parent=0 // pred_check_branch
    %471 = sbr.rel (0) target = $region17
  $region16: #{conv_bn_relu.3} parent=0 // pred_region
    _
  $region17: #{conv_bn_relu.3} parent=0 // pred_fallthru
    _
  // Predicated region
  $region18: #{conv_bn_relu.3} parent=0 // pred_check
    _
  $region19: #{conv_bn_relu.3} parent=0 // pred_check_branch
    %473 = sbr.rel (0) target = $region21
  $region20: #{conv_bn_relu.3} parent=0 // pred_region
    _
  $region21: #{conv_bn_relu.3} parent=0 // pred_fallthru
    _

// kernel: conv_bn_relu.2
$region0: #{conv_bn_relu.2}
  #allocation0 [shape = 'u32[]', space=smem, size = 0x4, offset = 0x4, fixed_abs, tag = 'smem constant byte address 0x4 - core index']
  #allocation1 [shape = 'u32[72,128]{1,0:T(1,128)}', space=vmem, size = 0x9000, scoped, tag = 'internal scratch']
  %s0 = inlined_call_operand.vmem [shape: bf16[512,36], index: 0, kind: input, shape index: {}]
  %s1 = inlined_call_operand.vmem [shape: bf16[36,128], index: 1, kind: input, shape index: {}]
  %s2 = inlined_call_operand.vmem [shape: bf16[512,128], index: 2, kind: output, shape index: {0}]
  %s3 = inlined_call_operand.vmem [shape: f32[1,2,128], index: 3, kind: output, shape index: {1}]
  %4 = xla_tuple %s2, %s3
  %s5 = sld [smem:[#allocation0]]
  $region26: #{conv_bn_relu.2} parent=0
    _
  %s7 = ssub.s32 1, %s5
  %s8 = scalar_select 0, %s7, %s5
  // Predicated region
  $region2: #{conv_bn_relu.2} parent=0 // pred_check
    _
  $region3: #{conv_bn_relu.2} parent=0 // pred_check_branch
    %10 = sbr.rel (0) target = $region5
  $region4: #{conv_bn_relu.2} parent=0 // pred_region
    _
  $region5: #{conv_bn_relu.2} parent=0 // pred_fallthru
    _
  // Predicated region
  $region6: #{conv_bn_relu.2} parent=0 // pred_check
    _
  $region7: #{conv_bn_relu.2} parent=0 // pred_check_branch
    %12 = sbr.rel (0) target = $region9
  $region8: #{conv_bn_relu.2} parent=0 // pred_region
    _
  $region9: #{conv_bn_relu.2} parent=0 // pred_fallthru
    _
  %v14 = vld [vmem:[%s1] sm:$0xf]
  %v15 = vld [vmem:[%s1 + $0x4] sm:$0xf]
  %v16 = vld [vmem:[%s1 + $0x8] sm:$0xf]
  %v17 = vld [vmem:[%s1 + $0xc] sm:$0xf]
  %v18 = vld [vmem:[%s1 + $0x10] sm:$0x3]
  %v19 = vld [vmem:[%s0] sm:$0xf]
  %v20 = vld [vmem:[%s0 + $0x4] sm:$0xf]
  %v21 = vld [vmem:[%s0 + $0x8] sm:$0xf]
  %v22 = vld [vmem:[%s0 + $0xc] sm:$0xf]
  %v23 = vld [vmem:[%s0 + $0x10] sm:$0xf]
  %v24 = vld [vmem:[%s0 + $0x14] sm:$0xf]
  %v25 = vld [vmem:[%s0 + $0x18] sm:$0xf]
  %v26 = vld [vmem:[%s0 + $0x1c] sm:$0xf]
  %v27 = vld [vmem:[%s0 + $0x20] sm:$0xf]
  %v28 = vld [vmem:[%s0 + $0x24] sm:$0xf]
  %v29 = vld [vmem:[%s0 + $0x28] sm:$0xf]
  %v30 = vld [vmem:[%s0 + $0x2c] sm:$0xf]
  %v31 = vld [vmem:[%s0 + $0x30] sm:$0xf]
  %v32 = vld [vmem:[%s0 + $0x34] sm:$0xf]
  %v33 = vld [vmem:[%s0 + $0x38] sm:$0xf]
  %v34 = vld [vmem:[%s0 + $0x3c] sm:$0xf]
  %v35 = vld [vmem:[%s0 + $0x40] sm:$0xf]
  %v36 = vld [vmem:[%s0 + $0x44] sm:$0xf]
  %v37 = vld [vmem:[%s0 + $0x48] sm:$0xf]
  %v38 = vld [vmem:[%s0 + $0x4c] sm:$0xf]
  %v39 = vld [vmem:[%s0 + $0x50] sm:$0xf]
  %v40 = vld [vmem:[%s0 + $0x54] sm:$0xf]
  %v41 = vld [vmem:[%s0 + $0x58] sm:$0xf]
  %v42 = vld [vmem:[%s0 + $0x5c] sm:$0xf]
  %v43 = vld [vmem:[%s0 + $0x60] sm:$0xf]
  %v44 = vld [vmem:[%s0 + $0x64] sm:$0xf]
  %v45 = vld [vmem:[%s0 + $0x68] sm:$0xf]
  %v46 = vld [vmem:[%s0 + $0x6c] sm:$0xf]
  %v47 = vld [vmem:[%s0 + $0x70] sm:$0xf]
  %v48 = vld [vmem:[%s0 + $0x74] sm:$0xf]
  %v49 = vld [vmem:[%s0 + $0x78] sm:$0xf]
  %v50 = vld [vmem:[%s0 + $0x7c] sm:$0xf]
  %v51 = vld [vmem:[%s0 + $0x80] sm:$0xf]
  %v52 = vld [vmem:[%s0 + $0x84] sm:$0xf]
  %v53 = vld [vmem:[%s0 + $0x88] sm:$0xf]
  %v54 = vld [vmem:[%s0 + $0x8c] sm:$0xf]
  %v55 = vld [vmem:[%s0 + $0x90] sm:$0xf]
  %v56 = vld [vmem:[%s0 + $0x94] sm:$0xf]
  %v57 = vld [vmem:[%s0 + $0x98] sm:$0xf]
  %v58 = vld [vmem:[%s0 + $0x9c] sm:$0xf]
  %v59 = vld [vmem:[%s0 + $0xa0] sm:$0xf]
  %v60 = vld [vmem:[%s0 + $0xa4] sm:$0xf]
  %v61 = vld [vmem:[%s0 + $0xa8] sm:$0xf]
  %v62 = vld [vmem:[%s0 + $0xac] sm:$0xf]
  %v63 = vld [vmem:[%s0 + $0xb0] sm:$0xf]
  %v64 = vld [vmem:[%s0 + $0xb4] sm:$0xf]
  %v65 = vld [vmem:[%s0 + $0xb8] sm:$0xf]
  %v66 = vld [vmem:[%s0 + $0xbc] sm:$0xf]
  %v67 = vld [vmem:[%s0 + $0xc0] sm:$0xf]
  %v68 = vld [vmem:[%s0 + $0xc4] sm:$0xf]
  %v69 = vld [vmem:[%s0 + $0xc8] sm:$0xf]
  %v70 = vld [vmem:[%s0 + $0xcc] sm:$0xf]
  %v71 = vld [vmem:[%s0 + $0xd0] sm:$0xf]
  %v72 = vld [vmem:[%s0 + $0xd4] sm:$0xf]
  %v73 = vld [vmem:[%s0 + $0xd8] sm:$0xf]
  %v74 = vld [vmem:[%s0 + $0xdc] sm:$0xf]
  %v75 = vld [vmem:[%s0 + $0xe0] sm:$0xf]
  %v76 = vld [vmem:[%s0 + $0xe4] sm:$0xf]
  %v77 = vld [vmem:[%s0 + $0xe8] sm:$0xf]
  %v78 = vld [vmem:[%s0 + $0xec] sm:$0xf]
  %v79 = vld [vmem:[%s0 + $0xf0] sm:$0xf]
  %v80 = vld [vmem:[%s0 + $0xf4] sm:$0xf]
  %v81 = vld [vmem:[%s0 + $0xf8] sm:$0xf]
  %v82 = vld [vmem:[%s0 + $0xfc] sm:$0xf]
  %v147 = vunpack.c.l.b16 %v19
  %v148 = vunpack.c.l.b16 %v20
  %v149 = vunpack.c.l.b16 %v21
  %v150 = vunpack.c.l.b16 %v22
  %v151 = vunpack.c.l.b16 %v23
  %v152 = vunpack.c.l.b16 %v24
  %v153 = vunpack.c.l.b16 %v25
  %v154 = vunpack.c.l.b16 %v26
  %v155 = vunpack.c.l.b16 %v27
  %v156 = vunpack.c.l.b16 %v28
  %v157 = vunpack.c.l.b16 %v29
  %v158 = vunpack.c.l.b16 %v30
  %v159 = vunpack.c.l.b16 %v31
  %v160 = vunpack.c.l.b16 %v32
  %v161 = vunpack.c.l.b16 %v33
  %v162 = vunpack.c.l.b16 %v34
  %v163 = vunpack.c.l.b16 %v35
  %v164 = vunpack.c.l.b16 %v36
  %v165 = vunpack.c.l.b16 %v37
  %v166 = vunpack.c.l.b16 %v38
  %v167 = vunpack.c.l.b16 %v39
  %v168 = vunpack.c.l.b16 %v40
  %v169 = vunpack.c.l.b16 %v41
  %v170 = vunpack.c.l.b16 %v42
  %v171 = vunpack.c.l.b16 %v43
  %v172 = vunpack.c.l.b16 %v44
  %v173 = vunpack.c.l.b16 %v45
  %v174 = vunpack.c.l.b16 %v46
  %v175 = vunpack.c.l.b16 %v47
  %v176 = vunpack.c.l.b16 %v48
  %v177 = vunpack.c.l.b16 %v49
  %v178 = vunpack.c.l.b16 %v50
  %v179 = vunpack.c.l.b16 %v51
  %v180 = vunpack.c.l.b16 %v52
  %v181 = vunpack.c.l.b16 %v53
  %v182 = vunpack.c.l.b16 %v54
  %v183 = vunpack.c.l.b16 %v55
  %v184 = vunpack.c.l.b16 %v56
  %v185 = vunpack.c.l.b16 %v57
  %v186 = vunpack.c.l.b16 %v58
  %v187 = vunpack.c.l.b16 %v59
  %v188 = vunpack.c.l.b16 %v60
  %v189 = vunpack.c.l.b16 %v61
  %v190 = vunpack.c.l.b16 %v62
  %v191 = vunpack.c.l.b16 %v63
  %v192 = vunpack.c.l.b16 %v64
  %v193 = vunpack.c.l.b16 %v65
  %v194 = vunpack.c.l.b16 %v66
  %v195 = vunpack.c.l.b16 %v67
  %v196 = vunpack.c.l.b16 %v68
  %v197 = vunpack.c.l.b16 %v69
  %v198 = vunpack.c.l.b16 %v70
  %v199 = vunpack.c.l.b16 %v71
  %v200 = vunpack.c.l.b16 %v72
  %v201 = vunpack.c.l.b16 %v73
  %v202 = vunpack.c.l.b16 %v74
  %v203 = vunpack.c.l.b16 %v75
  %v204 = vunpack.c.l.b16 %v76
  %v205 = vunpack.c.l.b16 %v77
  %v206 = vunpack.c.l.b16 %v78
  %v207 = vunpack.c.l.b16 %v79
  %v208 = vunpack.c.l.b16 %v80
  %v209 = vunpack.c.l.b16 %v81
  %v210 = vunpack.c.l.b16 %v82
  %v211 = vpack.c.b16 %v148, %v147
  %v212 = vpack.c.b16 %v150, %v149
  %v213 = vpack.c.b16 %v152, %v151
  %v214 = vpack.c.b16 %v154, %v153
  %v215 = vpack.c.b16 %v156, %v155
  %v216 = vpack.c.b16 %v158, %v157
  %v217 = vpack.c.b16 %v160, %v159
  %v218 = vpack.c.b16 %v162, %v161
  %v219 = vpack.c.b16 %v164, %v163
  %v220 = vpack.c.b16 %v166, %v165
  %v221 = vpack.c.b16 %v168, %v167
  %v222 = vpack.c.b16 %v170, %v169
  %v223 = vpack.c.b16 %v172, %v171
  %v224 = vpack.c.b16 %v174, %v173
  %v225 = vpack.c.b16 %v176, %v175
  %v226 = vpack.c.b16 %v178, %v177
  %v227 = vpack.c.b16 %v180, %v179
  %v228 = vpack.c.b16 %v182, %v181
  %v229 = vpack.c.b16 %v184, %v183
  %v230 = vpack.c.b16 %v186, %v185
  %v231 = vpack.c.b16 %v188, %v187
  %v232 = vpack.c.b16 %v190, %v189
  %v233 = vpack.c.b16 %v192, %v191
  %v234 = vpack.c.b16 %v194, %v193
  %v235 = vpack.c.b16 %v196, %v195
  %v236 = vpack.c.b16 %v198, %v197
  %v237 = vpack.c.b16 %v200, %v199
  %v238 = vpack.c.b16 %v202, %v201
  %v239 = vpack.c.b16 %v204, %v203
  %v240 = vpack.c.b16 %v206, %v205
  %v241 = vpack.c.b16 %v208, %v207
  %v242 = vpack.c.b16 %v210, %v209
  %v248 = vunpack.c.l.b16 %v14
  %v249 = vunpack.c.l.b16 %v15
  %v250 = vunpack.c.l.b16 %v16
  %v251 = vunpack.c.l.b16 %v17
  %v252 = vunpack.c.l.b16 %v18
  %v253 = vpack.c.b16 %v249, %v248
  %v254 = vpack.c.b16 %v251, %v250
  %v255 = vpack.c.b16 %v252, %v252
  %vm258 = vcmask 293888
  %v260 = vsel %vm258, %v211, 0
  %v263 = vsel %vm258, %v212, 0
  %v266 = vsel %vm258, %v213, 0
  %v269 = vsel %vm258, %v214, 0
  %v272 = vsel %vm258, %v215, 0
  %v275 = vsel %vm258, %v216, 0
  %v278 = vsel %vm258, %v217, 0
  %v281 = vsel %vm258, %v218, 0
  %v284 = vsel %vm258, %v219, 0
  %v287 = vsel %vm258, %v220, 0
  %v290 = vsel %vm258, %v221, 0
  %v293 = vsel %vm258, %v222, 0
  %v296 = vsel %vm258, %v223, 0
  %v299 = vsel %vm258, %v224, 0
  %v302 = vsel %vm258, %v225, 0
  %v305 = vsel %vm258, %v226, 0
  %v308 = vsel %vm258, %v227, 0
  %v311 = vsel %vm258, %v228, 0
  %v314 = vsel %vm258, %v229, 0
  %v317 = vsel %vm258, %v230, 0
  %v320 = vsel %vm258, %v231, 0
  %v323 = vsel %vm258, %v232, 0
  %v326 = vsel %vm258, %v233, 0
  %v329 = vsel %vm258, %v234, 0
  %v332 = vsel %vm258, %v235, 0
  %v335 = vsel %vm258, %v236, 0
  %v338 = vsel %vm258, %v237, 0
  %v341 = vsel %vm258, %v238, 0
  %v344 = vsel %vm258, %v239, 0
  %v347 = vsel %vm258, %v240, 0
  %v350 = vsel %vm258, %v241, 0
  %v353 = vsel %vm258, %v242, 0
  %vm355 = vcmask 1041408
  %v357 = vsel %vm355, %v255, 0
  %359 = vmatpush.bf16.msra.mxu0 0
  %360 = vmatpush.bf16.msra.mxu0 0
  %361 = vmatpush.bf16.msra.mxu0 0
  %362 = vmatpush.bf16.msra.mxu0 0
  %363 = vmatpush.bf16.msra.mxu0 0
  %364 = vmatpush.bf16.msra.mxu0 %v357
  %365 = vmatpush.bf16.msra.mxu0 %v254
  %366 = vmatpush.bf16.msra.mxu0 %v253
  %367 = vmatmul.bf16.gmra.mxu0 %v260
  %v368 = vpop.f32.mrf.mxu0
  %v369 = vadd.f32 0.0, %v368
  %v370 = vpop.f32.mrf.mxu0
  %v371 = vadd.f32 0.0, %v370
  %372 = vmatmul.bf16.gmra.mxu0 %v263
  %v373 = vpop.f32.mrf.mxu0
  %v374 = vadd.f32 0.0, %v373
  %v375 = vpop.f32.mrf.mxu0
  %v376 = vadd.f32 0.0, %v375
  %377 = vmatmul.bf16.gmra.mxu0 %v266
  %v378 = vpop.f32.mrf.mxu0
  %v379 = vadd.f32 0.0, %v378
  %v380 = vpop.f32.mrf.mxu0
  %v381 = vadd.f32 0.0, %v380
  %382 = vmatmul.bf16.gmra.mxu0 %v269
  %v383 = vpop.f32.mrf.mxu0
  %v384 = vadd.f32 0.0, %v383
  %v385 = vpop.f32.mrf.mxu0
  %v386 = vadd.f32 0.0, %v385
  %387 = vmatmul.bf16.gmra.mxu0 %v272
  %v388 = vpop.f32.mrf.mxu0
  %v389 = vadd.f32 0.0, %v388
  %v390 = vpop.f32.mrf.mxu0
  %v391 = vadd.f32 0.0, %v390
  %392 = vmatmul.bf16.gmra.mxu0 %v275
  %v393 = vpop.f32.mrf.mxu0
  %v394 = vadd.f32 0.0, %v393
  %v395 = vpop.f32.mrf.mxu0
  %v396 = vadd.f32 0.0, %v395
  %397 = vmatmul.bf16.gmra.mxu0 %v278
  %v398 = vpop.f32.mrf.mxu0
  %v399 = vadd.f32 0.0, %v398
  %v400 = vpop.f32.mrf.mxu0
  %v401 = vadd.f32 0.0, %v400
  %402 = vmatmul.bf16.gmra.mxu0 %v281
  %v403 = vpop.f32.mrf.mxu0
  %v404 = vadd.f32 0.0, %v403
  %v405 = vpop.f32.mrf.mxu0
  %v406 = vadd.f32 0.0, %v405
  %407 = vmatmul.bf16.gmra.mxu0 %v284
  %v408 = vpop.f32.mrf.mxu0
  %v409 = vadd.f32 0.0, %v408
  %v410 = vpop.f32.mrf.mxu0
  %v411 = vadd.f32 0.0, %v410
  %412 = vmatmul.bf16.gmra.mxu0 %v287
  %v413 = vpop.f32.mrf.mxu0
  %v414 = vadd.f32 0.0, %v413
  %v415 = vpop.f32.mrf.mxu0
  %v416 = vadd.f32 0.0, %v415
  %417 = vmatmul.bf16.gmra.mxu0 %v290
  %v418 = vpop.f32.mrf.mxu0
  %v419 = vadd.f32 0.0, %v418
  %v420 = vpop.f32.mrf.mxu0
  %v421 = vadd.f32 0.0, %v420
  %422 = vmatmul.bf16.gmra.mxu0 %v293
  %v423 = vpop.f32.mrf.mxu0
  %v424 = vadd.f32 0.0, %v423
  %v425 = vpop.f32.mrf.mxu0
  %v426 = vadd.f32 0.0, %v425
  %427 = vmatmul.bf16.gmra.mxu0 %v296
  %v428 = vpop.f32.mrf.mxu0
  %v429 = vadd.f32 0.0, %v428
  %v430 = vpop.f32.mrf.mxu0
  %v431 = vadd.f32 0.0, %v430
  %432 = vmatmul.bf16.gmra.mxu0 %v299
  %v433 = vpop.f32.mrf.mxu0
  %v434 = vadd.f32 0.0, %v433
  %v435 = vpop.f32.mrf.mxu0
  %v436 = vadd.f32 0.0, %v435
  %437 = vmatmul.bf16.gmra.mxu0 %v302
  %v438 = vpop.f32.mrf.mxu0
  %v439 = vadd.f32 0.0, %v438
  %v440 = vpop.f32.mrf.mxu0
  %v441 = vadd.f32 0.0, %v440
  %442 = vmatmul.bf16.gmra.mxu0 %v305
  %v443 = vpop.f32.mrf.mxu0
  %v444 = vadd.f32 0.0, %v443
  %v445 = vpop.f32.mrf.mxu0
  %v446 = vadd.f32 0.0, %v445
  %447 = vmatmul.bf16.gmra.mxu0 %v308
  %v448 = vpop.f32.mrf.mxu0
  %v449 = vadd.f32 0.0, %v448
  %v450 = vpop.f32.mrf.mxu0
  %v451 = vadd.f32 0.0, %v450
  %452 = vmatmul.bf16.gmra.mxu0 %v311
  %v453 = vpop.f32.mrf.mxu0
  %v454 = vadd.f32 0.0, %v453
  %v455 = vpop.f32.mrf.mxu0
  %v456 = vadd.f32 0.0, %v455
  %457 = vmatmul.bf16.gmra.mxu0 %v314
  %v458 = vpop.f32.mrf.mxu0
  %v459 = vadd.f32 0.0, %v458
  %v460 = vpop.f32.mrf.mxu0
  %v461 = vadd.f32 0.0, %v460
  %462 = vmatmul.bf16.gmra.mxu0 %v317
  %v463 = vpop.f32.mrf.mxu0
  %v464 = vadd.f32 0.0, %v463
  %v465 = vpop.f32.mrf.mxu0
  %v466 = vadd.f32 0.0, %v465
  %467 = vmatmul.bf16.gmra.mxu0 %v320
  %v468 = vpop.f32.mrf.mxu0
  %v469 = vadd.f32 0.0, %v468
  %v470 = vpop.f32.mrf.mxu0
  %v471 = vadd.f32 0.0, %v470
  %472 = vmatmul.bf16.gmra.mxu0 %v323
  %v473 = vpop.f32.mrf.mxu0
  %v474 = vadd.f32 0.0, %v473
  %v475 = vpop.f32.mrf.mxu0
  %v476 = vadd.f32 0.0, %v475
  %477 = vmatmul.bf16.gmra.mxu0 %v326
  %v478 = vpop.f32.mrf.mxu0
  %v479 = vadd.f32 0.0, %v478
  %v480 = vpop.f32.mrf.mxu0
  %v481 = vadd.f32 0.0, %v480
  %482 = vmatmul.bf16.gmra.mxu0 %v329
  %v483 = vpop.f32.mrf.mxu0
  %v484 = vadd.f32 0.0, %v483
  %v485 = vpop.f32.mrf.mxu0
  %v486 = vadd.f32 0.0, %v485
  %487 = vmatmul.bf16.gmra.mxu0 %v332
  %v488 = vpop.f32.mrf.mxu0
  %v489 = vadd.f32 0.0, %v488
  %v490 = vpop.f32.mrf.mxu0
  %v491 = vadd.f32 0.0, %v490
  %492 = vmatmul.bf16.gmra.mxu0 %v335
  %v493 = vpop.f32.mrf.mxu0
  %v494 = vadd.f32 0.0, %v493
  %v495 = vpop.f32.mrf.mxu0
  %v496 = vadd.f32 0.0, %v495
  %497 = vmatmul.bf16.gmra.mxu0 %v338
  %v498 = vpop.f32.mrf.mxu0
  %v499 = vadd.f32 0.0, %v498
  %v500 = vpop.f32.mrf.mxu0
  %v501 = vadd.f32 0.0, %v500
  %502 = vmatmul.bf16.gmra.mxu0 %v341
  %v503 = vpop.f32.mrf.mxu0
  %v504 = vadd.f32 0.0, %v503
  %v505 = vpop.f32.mrf.mxu0
  %v506 = vadd.f32 0.0, %v505
  %507 = vmatmul.bf16.gmra.mxu0 %v344
  %v508 = vpop.f32.mrf.mxu0
  %v509 = vadd.f32 0.0, %v508
  %v510 = vpop.f32.mrf.mxu0
  %v511 = vadd.f32 0.0, %v510
  %512 = vmatmul.bf16.gmra.mxu0 %v347
  %v513 = vpop.f32.mrf.mxu0
  %v514 = vadd.f32 0.0, %v513
  %v515 = vpop.f32.mrf.mxu0
  %v516 = vadd.f32 0.0, %v515
  %517 = vmatmul.bf16.gmra.mxu0 %v350
  %v518 = vpop.f32.mrf.mxu0
  %v519 = vadd.f32 0.0, %v518
  %v520 = vpop.f32.mrf.mxu0
  %v521 = vadd.f32 0.0, %v520
  %522 = vmatmul.bf16.gmra.mxu0 %v353
  %v523 = vpop.f32.mrf.mxu0
  %v524 = vadd.f32 0.0, %v523
  %v525 = vpop.f32.mrf.mxu0
  %v526 = vadd.f32 0.0, %v525
  %527 = vdwg.mxu0
  %v528 = vpack.c.bf16 %v369, %v369
  %v529 = vpack.c.bf16 %v371, %v371
  %v530 = vpack.c.bf16 %v374, %v374
  %v531 = vpack.c.bf16 %v376, %v376
  %v532 = vpack.c.bf16 %v379, %v379
  %v533 = vpack.c.bf16 %v381, %v381
  %v534 = vpack.c.bf16 %v384, %v384
  %v535 = vpack.c.bf16 %v386, %v386
  %v536 = vpack.c.bf16 %v389, %v389
  %v537 = vpack.c.bf16 %v391, %v391
  %v538 = vpack.c.bf16 %v394, %v394
  %v539 = vpack.c.bf16 %v396, %v396
  %v540 = vpack.c.bf16 %v399, %v399
  %v541 = vpack.c.bf16 %v401, %v401
  %v542 = vpack.c.bf16 %v404, %v404
  %v543 = vpack.c.bf16 %v406, %v406
  %v544 = vpack.c.bf16 %v409, %v409
  %v545 = vpack.c.bf16 %v411, %v411
  %v546 = vpack.c.bf16 %v414, %v414
  %v547 = vpack.c.bf16 %v416, %v416
  %v548 = vpack.c.bf16 %v419, %v419
  %v549 = vpack.c.bf16 %v421, %v421
  %v550 = vpack.c.bf16 %v424, %v424
  %v551 = vpack.c.bf16 %v426, %v426
  %v552 = vpack.c.bf16 %v429, %v429
  %v553 = vpack.c.bf16 %v431, %v431
  %v554 = vpack.c.bf16 %v434, %v434
  %v555 = vpack.c.bf16 %v436, %v436
  %v556 = vpack.c.bf16 %v439, %v439
  %v557 = vpack.c.bf16 %v441, %v441
  %v558 = vpack.c.bf16 %v444, %v444
  %v559 = vpack.c.bf16 %v446, %v446
  %v560 = vpack.c.bf16 %v449, %v449
  %v561 = vpack.c.bf16 %v451, %v451
  %v562 = vpack.c.bf16 %v454, %v454
  %v563 = vpack.c.bf16 %v456, %v456
  %v564 = vpack.c.bf16 %v459, %v459
  %v565 = vpack.c.bf16 %v461, %v461
  %v566 = vpack.c.bf16 %v464, %v464
  %v567 = vpack.c.bf16 %v466, %v466
  %v568 = vpack.c.bf16 %v469, %v469
  %v569 = vpack.c.bf16 %v471, %v471
  %v570 = vpack.c.bf16 %v474, %v474
  %v571 = vpack.c.bf16 %v476, %v476
  %v572 = vpack.c.bf16 %v479, %v479
  %v573 = vpack.c.bf16 %v481, %v481
  %v574 = vpack.c.bf16 %v484, %v484
  %v575 = vpack.c.bf16 %v486, %v486
  %v576 = vpack.c.bf16 %v489, %v489
  %v577 = vpack.c.bf16 %v491, %v491
  %v578 = vpack.c.bf16 %v494, %v494
  %v579 = vpack.c.bf16 %v496, %v496
  %v580 = vpack.c.bf16 %v499, %v499
  %v581 = vpack.c.bf16 %v501, %v501
  %v582 = vpack.c.bf16 %v504, %v504
  %v583 = vpack.c.bf16 %v506, %v506
  %v584 = vpack.c.bf16 %v509, %v509
  %v585 = vpack.c.bf16 %v511, %v511
  %v586 = vpack.c.bf16 %v514, %v514
  %v587 = vpack.c.bf16 %v516, %v516
  %v588 = vpack.c.bf16 %v519, %v519
  %v589 = vpack.c.bf16 %v521, %v521
  %v590 = vpack.c.bf16 %v524, %v524
  %v591 = vpack.c.bf16 %v526, %v526
  %592 = vst [vmem:[%s2] sm:$0xf] %v528
  %593 = vst [vmem:[%s2 + $0x4] sm:$0xf] %v529
  %594 = vst [vmem:[%s2 + $0x8] sm:$0xf] %v530
  %595 = vst [vmem:[%s2 + $0xc] sm:$0xf] %v531
  %596 = vst [vmem:[%s2 + $0x10] sm:$0xf] %v532
  %597 = vst [vmem:[%s2 + $0x14] sm:$0xf] %v533
  %598 = vst [vmem:[%s2 + $0x18] sm:$0xf] %v534
  %599 = vst [vmem:[%s2 + $0x1c] sm:$0xf] %v535
  %600 = vst [vmem:[%s2 + $0x20] sm:$0xf] %v536
  %601 = vst [vmem:[%s2 + $0x24] sm:$0xf] %v537
  %602 = vst [vmem:[%s2 + $0x28] sm:$0xf] %v538
  %603 = vst [vmem:[%s2 + $0x2c] sm:$0xf] %v539
  %604 = vst [vmem:[%s2 + $0x30] sm:$0xf] %v540
  %605 = vst [vmem:[%s2 + $0x34] sm:$0xf] %v541
  %606 = vst [vmem:[%s2 + $0x38] sm:$0xf] %v542
  %607 = vst [vmem:[%s2 + $0x3c] sm:$0xf] %v543
  %608 = vst [vmem:[%s2 + $0x40] sm:$0xf] %v544
  %609 = vst [vmem:[%s2 + $0x44] sm:$0xf] %v545
  %610 = vst [vmem:[%s2 + $0x48] sm:$0xf] %v546
  %611 = vst [vmem:[%s2 + $0x4c] sm:$0xf] %v547
  %612 = vst [vmem:[%s2 + $0x50] sm:$0xf] %v548
  %613 = vst [vmem:[%s2 + $0x54] sm:$0xf] %v549
  %614 = vst [vmem:[%s2 + $0x58] sm:$0xf] %v550
  %615 = vst [vmem:[%s2 + $0x5c] sm:$0xf] %v551
  %616 = vst [vmem:[%s2 + $0x60] sm:$0xf] %v552
  %617 = vst [vmem:[%s2 + $0x64] sm:$0xf] %v553
  %618 = vst [vmem:[%s2 + $0x68] sm:$0xf] %v554
  %619 = vst [vmem:[%s2 + $0x6c] sm:$0xf] %v555
  %620 = vst [vmem:[%s2 + $0x70] sm:$0xf] %v556
  %621 = vst [vmem:[%s2 + $0x74] sm:$0xf] %v557
  %622 = vst [vmem:[%s2 + $0x78] sm:$0xf] %v558
  %623 = vst [vmem:[%s2 + $0x7c] sm:$0xf] %v559
  %624 = vst [vmem:[%s2 + $0x80] sm:$0xf] %v560
  %625 = vst [vmem:[%s2 + $0x84] sm:$0xf] %v561
  %626 = vst [vmem:[%s2 + $0x88] sm:$0xf] %v562
  %627 = vst [vmem:[%s2 + $0x8c] sm:$0xf] %v563
  %628 = vst [vmem:[%s2 + $0x90] sm:$0xf] %v564
  %629 = vst [vmem:[%s2 + $0x94] sm:$0xf] %v565
  %630 = vst [vmem:[%s2 + $0x98] sm:$0xf] %v566
  %631 = vst [vmem:[%s2 + $0x9c] sm:$0xf] %v567
  %632 = vst [vmem:[%s2 + $0xa0] sm:$0xf] %v568
  %633 = vst [vmem:[%s2 + $0xa4] sm:$0xf] %v569
  %634 = vst [vmem:[%s2 + $0xa8] sm:$0xf] %v570
  %635 = vst [vmem:[%s2 + $0xac] sm:$0xf] %v571
  %636 = vst [vmem:[%s2 + $0xb0] sm:$0xf] %v572
  %637 = vst [vmem:[%s2 + $0xb4] sm:$0xf] %v573
  %638 = vst [vmem:[%s2 + $0xb8] sm:$0xf] %v574
  %639 = vst [vmem:[%s2 + $0xbc] sm:$0xf] %v575
  %640 = vst [vmem:[%s2 + $0xc0] sm:$0xf] %v576
  %641 = vst [vmem:[%s2 + $0xc4] sm:$0xf] %v577
  %642 = vst [vmem:[%s2 + $0xc8] sm:$0xf] %v578
  %643 = vst [vmem:[%s2 + $0xcc] sm:$0xf] %v579
  %644 = vst [vmem:[%s2 + $0xd0] sm:$0xf] %v580
  %645 = vst [vmem:[%s2 + $0xd4] sm:$0xf] %v581
  %646 = vst [vmem:[%s2 + $0xd8] sm:$0xf] %v582
  %647 = vst [vmem:[%s2 + $0xdc] sm:$0xf] %v583
  %648 = vst [vmem:[%s2 + $0xe0] sm:$0xf] %v584
  %649 = vst [vmem:[%s2 + $0xe4] sm:$0xf] %v585
  %650 = vst [vmem:[%s2 + $0xe8] sm:$0xf] %v586
  %651 = vst [vmem:[%s2 + $0xec] sm:$0xf] %v587
  %652 = vst [vmem:[%s2 + $0xf0] sm:$0xf] %v588
  %653 = vst [vmem:[%s2 + $0xf4] sm:$0xf] %v589
  %654 = vst [vmem:[%s2 + $0xf8] sm:$0xf] %v590
  %655 = vst [vmem:[%s2 + $0xfc] sm:$0xf] %v591
  %v656 = vadd.f32 %v369, %v371
  %v657 = vadd.f32 %v656, %v374
  %v658 = vadd.f32 %v657, %v376
  %v659 = vadd.f32 %v658, %v379
  %v660 = vadd.f32 %v659, %v381
  %v661 = vadd.f32 %v660, %v384
  %v662 = vadd.f32 %v661, %v386
  %v663 = vadd.f32 %v662, %v389
  %v664 = vadd.f32 %v663, %v391
  %v665 = vadd.f32 %v664, %v394
  %v666 = vadd.f32 %v665, %v396
  %v667 = vadd.f32 %v666, %v399
  %v668 = vadd.f32 %v667, %v401
  %v669 = vadd.f32 %v668, %v404
  %v670 = vadd.f32 %v669, %v406
  %v671 = vadd.f32 %v670, %v409
  %v672 = vadd.f32 %v671, %v411
  %v673 = vadd.f32 %v672, %v414
  %v674 = vadd.f32 %v673, %v416
  %v675 = vadd.f32 %v674, %v419
  %v676 = vadd.f32 %v675, %v421
  %v677 = vadd.f32 %v676, %v424
  %v678 = vadd.f32 %v677, %v426
  %v679 = vadd.f32 %v678, %v429
  %v680 = vadd.f32 %v679, %v431
  %v681 = vadd.f32 %v680, %v434
  %v682 = vadd.f32 %v681, %v436
  %v683 = vadd.f32 %v682, %v439
  %v684 = vadd.f32 %v683, %v441
  %v685 = vadd.f32 %v684, %v444
  %v686 = vadd.f32 %v685, %v446
  %v687 = vadd.f32 %v686, %v449
  %v688 = vadd.f32 %v687, %v451
  %v689 = vadd.f32 %v688, %v454
  %v690 = vadd.f32 %v689, %v456
  %v691 = vadd.f32 %v690, %v459
  %v692 = vadd.f32 %v691, %v461
  %v693 = vadd.f32 %v692, %v464
  %v694 = vadd.f32 %v693, %v466
  %v695 = vadd.f32 %v694, %v469
  %v696 = vadd.f32 %v695, %v471
  %v697 = vadd.f32 %v696, %v474
  %v698 = vadd.f32 %v697, %v476
  %v699 = vadd.f32 %v698, %v479
  %v700 = vadd.f32 %v699, %v481
  %v701 = vadd.f32 %v700, %v484
  %v702 = vadd.f32 %v701, %v486
  %v703 = vadd.f32 %v702, %v489
  %v704 = vadd.f32 %v703, %v491
  %v705 = vadd.f32 %v704, %v494
  %v706 = vadd.f32 %v705, %v496
  %v707 = vadd.f32 %v706, %v499
  %v708 = vadd.f32 %v707, %v501
  %v709 = vadd.f32 %v708, %v504
  %v710 = vadd.f32 %v709, %v506
  %v711 = vadd.f32 %v710, %v509
  %v712 = vadd.f32 %v711, %v511
  %v713 = vadd.f32 %v712, %v514
  %v714 = vadd.f32 %v713, %v516
  %v715 = vadd.f32 %v714, %v519
  %v716 = vadd.f32 %v715, %v521
  %v717 = vadd.f32 %v716, %v524
  %v718 = vadd.f32 %v717, %v526
  %v719 = vrot.slane %v718, 4
  %v720 = vadd.f32 %v718, %v719
  %v721 = vrot.slane %v720, 2
  %v722 = vadd.f32 %v720, %v721
  %v723 = vrot.slane %v722, 1
  %v724 = vadd.f32 %v722, %v723
  %725 = vst [vmem:[%s3] sm:$0x1] %v724
  %v726 = vmul.f32 %v369, %v369
  %v727 = vmul.f32 %v371, %v371
  %v728 = vmul.f32 %v374, %v374
  %v729 = vmul.f32 %v376, %v376
  %v730 = vmul.f32 %v379, %v379
  %v731 = vmul.f32 %v381, %v381
  %v732 = vmul.f32 %v384, %v384
  %v733 = vmul.f32 %v386, %v386
  %v734 = vmul.f32 %v389, %v389
  %v735 = vmul.f32 %v391, %v391
  %v736 = vmul.f32 %v394, %v394
  %v737 = vmul.f32 %v396, %v396
  %v738 = vmul.f32 %v399, %v399
  %v739 = vmul.f32 %v401, %v401
  %v740 = vmul.f32 %v404, %v404
  %v741 = vmul.f32 %v406, %v406
  %v742 = vmul.f32 %v409, %v409
  %v743 = vmul.f32 %v411, %v411
  %v744 = vmul.f32 %v414, %v414
  %v745 = vmul.f32 %v416, %v416
  %v746 = vmul.f32 %v419, %v419
  %v747 = vmul.f32 %v421, %v421
  %v748 = vmul.f32 %v424, %v424
  %v749 = vmul.f32 %v426, %v426
  %v750 = vmul.f32 %v429, %v429
  %v751 = vmul.f32 %v431, %v431
  %v752 = vmul.f32 %v434, %v434
  %v753 = vmul.f32 %v436, %v436
  %v754 = vmul.f32 %v439, %v439
  %v755 = vmul.f32 %v441, %v441
  %v756 = vmul.f32 %v444, %v444
  %v757 = vmul.f32 %v446, %v446
  %v758 = vmul.f32 %v449, %v449
  %v759 = vmul.f32 %v451, %v451
  %v760 = vmul.f32 %v454, %v454
  %v761 = vmul.f32 %v456, %v456
  %v762 = vmul.f32 %v459, %v459
  %v763 = vmul.f32 %v461, %v461
  %v764 = vmul.f32 %v464, %v464
  %v765 = vmul.f32 %v466, %v466
  %v766 = vmul.f32 %v469, %v469
  %v767 = vmul.f32 %v471, %v471
  %v768 = vmul.f32 %v474, %v474
  %v769 = vmul.f32 %v476, %v476
  %v770 = vmul.f32 %v479, %v479
  %v771 = vmul.f32 %v481, %v481
  %v772 = vmul.f32 %v484, %v484
  %v773 = vmul.f32 %v486, %v486
  %v774 = vmul.f32 %v489, %v489
  %v775 = vmul.f32 %v491, %v491
  %v776 = vmul.f32 %v494, %v494
  %v777 = vmul.f32 %v496, %v496
  %v778 = vmul.f32 %v499, %v499
  %v779 = vmul.f32 %v501, %v501
  %v780 = vmul.f32 %v504, %v504
  %v781 = vmul.f32 %v506, %v506
  %v782 = vmul.f32 %v509, %v509
  %v783 = vmul.f32 %v511, %v511
  %v784 = vmul.f32 %v514, %v514
  %v785 = vmul.f32 %v516, %v516
  %v786 = vmul.f32 %v519, %v519
  %v787 = vmul.f32 %v521, %v521
  %v788 = vmul.f32 %v524, %v524
  %v789 = vmul.f32 %v526, %v526
  %v790 = vadd.f32 %v726, %v727
  %v791 = vadd.f32 %v790, %v728
  %v792 = vadd.f32 %v791, %v729
  %v793 = vadd.f32 %v792, %v730
  %v794 = vadd.f32 %v793, %v731
  %v795 = vadd.f32 %v794, %v732
  %v796 = vadd.f32 %v795, %v733
  %v797 = vadd.f32 %v796, %v734
  %v798 = vadd.f32 %v797, %v735
  %v799 = vadd.f32 %v798, %v736
  %v800 = vadd.f32 %v799, %v737
  %v801 = vadd.f32 %v800, %v738
  %v802 = vadd.f32 %v801, %v739
  %v803 = vadd.f32 %v802, %v740
  %v804 = vadd.f32 %v803, %v741
  %v805 = vadd.f32 %v804, %v742
  %v806 = vadd.f32 %v805, %v743
  %v807 = vadd.f32 %v806, %v744
  %v808 = vadd.f32 %v807, %v745
  %v809 = vadd.f32 %v808, %v746
  %v810 = vadd.f32 %v809, %v747
  %v811 = vadd.f32 %v810, %v748
  %v812 = vadd.f32 %v811, %v749
  %v813 = vadd.f32 %v812, %v750
  %v814 = vadd.f32 %v813, %v751
  %v815 = vadd.f32 %v814, %v752
  %v816 = vadd.f32 %v815, %v753
  %v817 = vadd.f32 %v816, %v754
  %v818 = vadd.f32 %v817, %v755
  %v819 = vadd.f32 %v818, %v756
  %v820 = vadd.f32 %v819, %v757
  %v821 = vadd.f32 %v820, %v758
  %v822 = vadd.f32 %v821, %v759
  %v823 = vadd.f32 %v822, %v760
  %v824 = vadd.f32 %v823, %v761
  %v825 = vadd.f32 %v824, %v762
  %v826 = vadd.f32 %v825, %v763
  %v827 = vadd.f32 %v826, %v764
  %v828 = vadd.f32 %v827, %v765
  %v829 = vadd.f32 %v828, %v766
  %v830 = vadd.f32 %v829, %v767
  %v831 = vadd.f32 %v830, %v768
  %v832 = vadd.f32 %v831, %v769
  %v833 = vadd.f32 %v832, %v770
  %v834 = vadd.f32 %v833, %v771
  %v835 = vadd.f32 %v834, %v772
  %v836 = vadd.f32 %v835, %v773
  %v837 = vadd.f32 %v836, %v774
  %v838 = vadd.f32 %v837, %v775
  %v839 = vadd.f32 %v838, %v776
  %v840 = vadd.f32 %v839, %v777
  %v841 = vadd.f32 %v840, %v778
  %v842 = vadd.f32 %v841, %v779
  %v843 = vadd.f32 %v842, %v780
  %v844 = vadd.f32 %v843, %v781
  %v845 = vadd.f32 %v844, %v782
  %v846 = vadd.f32 %v845, %v783
  %v847 = vadd.f32 %v846, %v784
  %v848 = vadd.f32 %v847, %v785
  %v849 = vadd.f32 %v848, %v786
  %v850 = vadd.f32 %v849, %v787
  %v851 = vadd.f32 %v850, %v788
  %v852 = vadd.f32 %v851, %v789
  %v853 = vrot.slane %v852, 4
  %v854 = vadd.f32 %v852, %v853
  %v855 = vrot.slane %v854, 2
  %v856 = vadd.f32 %v854, %v855
  %v857 = vrot.slane %v856, 1
  %v858 = vadd.f32 %v856, %v857
  %859 = vst [vmem:[%s3 + $0x1] sm:$0x1] %v858
  // Predicated region
  $region10: #{conv_bn_relu.2} parent=0 // pred_check
    _
  $region11: #{conv_bn_relu.2} parent=0 // pred_check_branch
    %861 = sbr.rel (0) target = $region13
  $region12: #{conv_bn_relu.2} parent=0 // pred_region
    _
  $region13: #{conv_bn_relu.2} parent=0 // pred_fallthru
    _
  // Predicated region
  $region14: #{conv_bn_relu.2} parent=0 // pred_check
    _
  $region15: #{conv_bn_relu.2} parent=0 // pred_check_branch
    %863 = sbr.rel (0) target = $region17
  $region16: #{conv_bn_relu.2} parent=0 // pred_region
    _
  $region17: #{conv_bn_relu.2} parent=0 // pred_fallthru
    _
  // Predicated region
  $region18: #{conv_bn_relu.2} parent=0 // pred_check
    _
  $region19: #{conv_bn_relu.2} parent=0 // pred_check_branch
    %865 = sbr.rel (0) target = $region21
  $region20: #{conv_bn_relu.2} parent=0 // pred_region
    _
  $region21: #{conv_bn_relu.2} parent=0 // pred_fallthru
    _
  // Predicated region
  $region22: #{conv_bn_relu.2} parent=0 // pred_check
    _
  $region23: #{conv_bn_relu.2} parent=0 // pred_check_branch
    %867 = sbr.rel (0) target = $region25
  $region24: #{conv_bn_relu.2} parent=0 // pred_region
    _
  $region25: #{conv_bn_relu.2} parent=0 // pred_fallthru
    _

</llo_original>
